<compile_context>
chip_gen: v6e
topology: v6e:2x2x1
jax: 0.10.0
libtpu: 0.0.40
codegen_flags: <defaults>
</compile_context>

<pallas_src>
import functools

import jax
import jax.numpy as jnp
from jax.experimental import pallas as pl
from jax.experimental.pallas import tpu as pltpu


def _conv_bn_relu_kernel(x_ref, w_ref, o_ref, *, H, W, KH, KW, Ho, Wo):
    # x_ref: (N, Cin, H*W)          f32   NCHW images, spatial flattened (lane-dense)
    # w_ref: (Cout, KH*KW*Cin + 1)  bf16  BN-scaled conv weights + folded bias column
    # o_ref: (N, Cout, H*W)         f32   full lane-dense output (wrapper crops Ho,Wo)
    n_img, cin, hw = x_ref.shape

    # Roll-based im2col is only valid for VALID, stride-1 conv: the deepest tap
    # of the last *kept* output position reads exactly the last input element,
    # so the lane-rotation wrap-around never lands in a kept column.
    assert (Ho - 1) * W + (Wo - 1) + (KH - 1) * W + (KW - 1) == H * W - 1
    assert hw % 128 == 0  # lane-dense blocks -> unmasked vector stores

    w = w_ref[...]                                  # (Cout, K+1) bf16, hoisted
    ones_row = jnp.ones((1, hw), jnp.float32)       # bias row, hoisted out of n-loop

    for n in range(n_img):
        xi = x_ref[n]                               # (Cin, H*W) f32
        taps = []
        for kh in range(KH):
            for kw in range(KW):
                d = kh * W + kw                     # static tap offset
                taps.append(xi if d == 0
                            else pltpu.roll(xi, shift=hw - d, axis=1))
        taps.append(ones_row)                       # consumes the bias column of w
        patches = jnp.concatenate(taps, axis=0)     # (K+1, H*W) f32

        # One bf16 x bf16 MXU matmul per image; bias folded in via the ones row.
        acc = jnp.dot(w, patches.astype(jnp.bfloat16),
                      preferred_element_type=jnp.float32)   # (Cout, H*W) f32
        o_ref[n] = jnp.maximum(acc, 0.0).astype(o_ref.dtype)   # fused ReLU


@functools.partial(jax.jit, static_argnames=("eps",))
def _forward_impl(x_nchw, conv_w_oihw, conv_b, gamma, beta,
                  running_mean, running_var, eps):
    N, Cin, H, W = x_nchw.shape
    Cout, _, KH, KW = conv_w_oihw.shape
    Ho, Wo = H - KH + 1, W - KW + 1               # Conv2d(..., 3): VALID, stride 1

    # TODO(synk): BatchNorm is implemented in inference mode (running stats);
    # PyTorch train-mode batch statistics / running-stat updates are not done here.
    inv_std = 1.0 / jnp.sqrt(running_var + eps)
    scale = (gamma * inv_std).astype(jnp.float32)                     # (Cout,)
    # Fold BN scale into the weights; fold conv bias + BN shift into a bias
    # column appended to the weight matrix (K -> K+1, matched by a ones row).
    w_mat = (jnp.transpose(conv_w_oihw, (0, 2, 3, 1))                 # (Cout,KH,KW,Cin)
             .reshape(Cout, KH * KW * Cin) * scale[:, None])
    bias = (conv_b - running_mean) * scale + beta                     # (Cout,)
    w_full = jnp.concatenate([w_mat, bias[:, None]], axis=1).astype(jnp.bfloat16)

    x_flat = x_nchw.astype(jnp.float32).reshape(N, Cin, H * W)        # free reshape

    kernel = functools.partial(_conv_bn_relu_kernel,
                               H=H, W=W, KH=KH, KW=KW, Ho=Ho, Wo=Wo)

    cost = pl.CostEstimate(
        flops=2 * N * H * W * (KH * KW * Cin + 1) * Cout,
        transcendentals=0,
        bytes_accessed=4 * (x_flat.size + N * Cout * H * W) + 2 * w_full.size)

    out_flat = pl.pallas_call(
        kernel,
        out_shape=jax.ShapeDtypeStruct((N, Cout, H * W), jnp.float32),
        grid=(1,),
        in_specs=[
            pl.BlockSpec((N, Cin, H * W), lambda g: (0, 0, 0)),
            pl.BlockSpec((Cout, KH * KW * Cin + 1), lambda g: (0, 0)),
        ],
        out_specs=pl.BlockSpec((N, Cout, H * W), lambda g: (0, 0, 0)),
        compiler_params=pltpu.CompilerParams(
            dimension_semantics=("arbitrary",)),
        cost_estimate=cost,
    )(x_flat, w_full)

    # Crop outside the kernel (reviewer option (b)): drop the invalid conv
    # rows/columns that padded the stores up to a lane-dense 256-wide block.
    return out_flat.reshape(N, Cout, H, W)[:, :, :Ho, :Wo]


def basic_model_forward(x_nchw, conv_w_oihw, conv_b, gamma, beta,
                        running_mean, running_var, eps=1e-5):
    """Forward of BasicModel. Returns (out_nchw, input_shape) like the nn.Module."""
    out = _forward_impl(x_nchw, conv_w_oihw, conv_b, gamma, beta,
                        running_mean, running_var, eps)
    return out, tuple(x_nchw.shape)


def _reference_forward(x_nchw, conv_w_oihw, conv_b, gamma, beta, mean, var, eps=1e-5):
    # Plain-JAX reference (lax conv) for the correctness check.
    y = jax.lax.conv_general_dilated(
        x_nchw, conv_w_oihw, window_strides=(1, 1), padding="VALID",
        dimension_numbers=("NCHW", "OIHW", "NCHW"))
    y = y + conv_b[None, :, None, None]
    y = (y - mean[None, :, None, None]) / jnp.sqrt(var[None, :, None, None] + eps)
    y = y * gamma[None, :, None, None] + beta[None, :, None, None]
    return jnp.maximum(y, 0.0)


if __name__ == "__main__":
    key = jax.random.PRNGKey(0)
    k_x, k_w, k_b, k_g, k_bt, k_m, k_v = jax.random.split(key, 7)

    # Input: NCHW, 8 input channels as Conv2d(8, 8, 3) requires.
    N, C, H, W = 2, 8, 16, 16
    x = jax.random.normal(k_x, (N, C, H, W), dtype=jnp.float32)

    # Deterministic parameter init (shapes from the module's __init__), OIHW weights.
    conv_w = jax.random.normal(k_w, (8, 8, 3, 3), dtype=jnp.float32) * 0.1
    conv_b = jax.random.normal(k_b, (8,), dtype=jnp.float32) * 0.1
    gamma = 1.0 + 0.1 * jax.random.normal(k_g, (8,), dtype=jnp.float32)
    beta = 0.1 * jax.random.normal(k_bt, (8,), dtype=jnp.float32)
    running_mean = 0.1 * jax.random.normal(k_m, (8,), dtype=jnp.float32)
    running_var = jnp.abs(1.0 + 0.1 * jax.random.normal(k_v, (8,), dtype=jnp.float32))

    out, size = basic_model_forward(x, conv_w, conv_b, gamma, beta,
                                    running_mean, running_var)
    out = jax.block_until_ready(out)

    ref = _reference_forward(x, conv_w, conv_b, gamma, beta,
                             running_mean, running_var)
    assert out.shape == (N, 8, H - 2, W - 2)
    assert size == (N, C, H, W)
    # bf16 MXU inputs -> ~1e-2-level differences vs the pure-f32 reference.
    assert jnp.allclose(out, ref, atol=5e-2, rtol=5e-2), "mismatch vs reference"

    print("KERNEL_OK")
</pallas_src>

<mosaic_0001>
module attributes {stable_mosaic.version = 11 : i64} {
  func.func @_conv_bn_relu_kernel(%arg0: i32, %arg1: memref<2x8x256xf32, #tpu.memory_space<vmem>>, %arg2: memref<8x73xbf16, #tpu.memory_space<vmem>>, %arg3: memref<2x8x256xf32, #tpu.memory_space<vmem>>) attributes {dimension_semantics = [#tpu.dimension_semantics<arbitrary>], iteration_bounds = array<i64: 1>, scalar_prefetch = 0 : i64, scratch_operands = 0 : i64, tpu.core_type = #tpu.core_type<tc>, window_params = [{pipeline_mode = #tpu.pipeline_mode<synchronous>, transform_indices = @transform_0, window_bounds = array<i64: 2, 8, 256>}, {pipeline_mode = #tpu.pipeline_mode<synchronous>, transform_indices = @transform_1, window_bounds = array<i64: 8, 73>}, {pipeline_mode = #tpu.pipeline_mode<synchronous>, transform_indices = @transform_2, window_bounds = array<i64: 2, 8, 256>}]} {
    %c0 = arith.constant 0 : index
    %c0_0 = arith.constant 0 : index
    %0 = vector.load %arg2[%c0, %c0_0] : memref<8x73xbf16, #tpu.memory_space<vmem>>, vector<8x73xbf16>
    %cst = arith.constant 1.000000e+00 : f32
    %1 = vector.broadcast %cst : f32 to vector<1x256xf32>
    %c0_1 = arith.constant 0 : index
    %c0_2 = arith.constant 0 : index
    %c0_3 = arith.constant 0 : index
    %2 = vector.load %arg1[%c0_1, %c0_2, %c0_3] : memref<2x8x256xf32, #tpu.memory_space<vmem>>, vector<1x8x256xf32>
    %3 = vector.shape_cast %2 : vector<1x8x256xf32> to vector<8x256xf32>
    %c255_i32 = arith.constant 255 : i32
    %4 = tpu.dynamic_rotate %3 by %c255_i32 dim 1 : vector<8x256xf32>, i32 -> vector<8x256xf32>
    %c254_i32 = arith.constant 254 : i32
    %5 = tpu.dynamic_rotate %3 by %c254_i32 dim 1 : vector<8x256xf32>, i32 -> vector<8x256xf32>
    %c240_i32 = arith.constant 240 : i32
    %6 = tpu.dynamic_rotate %3 by %c240_i32 dim 1 : vector<8x256xf32>, i32 -> vector<8x256xf32>
    %c239_i32 = arith.constant 239 : i32
    %7 = tpu.dynamic_rotate %3 by %c239_i32 dim 1 : vector<8x256xf32>, i32 -> vector<8x256xf32>
    %c238_i32 = arith.constant 238 : i32
    %8 = tpu.dynamic_rotate %3 by %c238_i32 dim 1 : vector<8x256xf32>, i32 -> vector<8x256xf32>
    %c224_i32 = arith.constant 224 : i32
    %9 = tpu.dynamic_rotate %3 by %c224_i32 dim 1 : vector<8x256xf32>, i32 -> vector<8x256xf32>
    %c223_i32 = arith.constant 223 : i32
    %10 = tpu.dynamic_rotate %3 by %c223_i32 dim 1 : vector<8x256xf32>, i32 -> vector<8x256xf32>
    %c222_i32 = arith.constant 222 : i32
    %11 = tpu.dynamic_rotate %3 by %c222_i32 dim 1 : vector<8x256xf32>, i32 -> vector<8x256xf32>
    %12 = tpu.concatenate %3, %4, %5, %6, %7, %8, %9, %10, %11, %1 in 0 : vector<8x256xf32>, vector<8x256xf32>, vector<8x256xf32>, vector<8x256xf32>, vector<8x256xf32>, vector<8x256xf32>, vector<8x256xf32>, vector<8x256xf32>, vector<8x256xf32>, vector<1x256xf32> -> vector<73x256xf32>
    %13 = arith.truncf %12 : vector<73x256xf32> to vector<73x256xbf16>
    %cst_4 = arith.constant dense<0.000000e+00> : vector<8x256xf32>
    %14 = tpu.matmul %0, %13, %cst_4 {dimension_numbers = #tpu.dot_dimension_numbers<[1], [0], [0], [1], [0, 0, 1, 1], [], []>} : vector<8x73xbf16>, vector<73x256xbf16>, vector<8x256xf32> -> vector<8x256xf32>
    %cst_5 = arith.constant 0.000000e+00 : f32
    %15 = vector.broadcast %cst_5 : f32 to vector<8x256xf32>
    %16 = arith.maximumf %14, %15 : vector<8x256xf32>
    %c0_6 = arith.constant 0 : index
    %c0_7 = arith.constant 0 : index
    %c0_8 = arith.constant 0 : index
    %17 = vector.load %arg3[%c0_6, %c0_7, %c0_8] : memref<2x8x256xf32, #tpu.memory_space<vmem>>, vector<1x8x256xf32>
    %18 = vector.shape_cast %17 : vector<1x8x256xf32> to vector<8x256xf32>
    %19 = vector.shape_cast %16 : vector<8x256xf32> to vector<1x8x256xf32>
    tpu.vector_store %arg3[%c0_6, %c0_7, %c0_8], %19 {strides = array<i32>} : memref<2x8x256xf32, #tpu.memory_space<vmem>>, vector<1x8x256xf32>,
    %c1 = arith.constant 1 : index
    %c0_9 = arith.constant 0 : index
    %c0_10 = arith.constant 0 : index
    %20 = vector.load %arg1[%c1, %c0_9, %c0_10] : memref<2x8x256xf32, #tpu.memory_space<vmem>>, vector<1x8x256xf32>
    %21 = vector.shape_cast %20 : vector<1x8x256xf32> to vector<8x256xf32>
    %c255_i32_11 = arith.constant 255 : i32
    %22 = tpu.dynamic_rotate %21 by %c255_i32_11 dim 1 : vector<8x256xf32>, i32 -> vector<8x256xf32>
    %c254_i32_12 = arith.constant 254 : i32
    %23 = tpu.dynamic_rotate %21 by %c254_i32_12 dim 1 : vector<8x256xf32>, i32 -> vector<8x256xf32>
    %c240_i32_13 = arith.constant 240 : i32
    %24 = tpu.dynamic_rotate %21 by %c240_i32_13 dim 1 : vector<8x256xf32>, i32 -> vector<8x256xf32>
    %c239_i32_14 = arith.constant 239 : i32
    %25 = tpu.dynamic_rotate %21 by %c239_i32_14 dim 1 : vector<8x256xf32>, i32 -> vector<8x256xf32>
    %c238_i32_15 = arith.constant 238 : i32
    %26 = tpu.dynamic_rotate %21 by %c238_i32_15 dim 1 : vector<8x256xf32>, i32 -> vector<8x256xf32>
    %c224_i32_16 = arith.constant 224 : i32
    %27 = tpu.dynamic_rotate %21 by %c224_i32_16 dim 1 : vector<8x256xf32>, i32 -> vector<8x256xf32>
    %c223_i32_17 = arith.constant 223 : i32
    %28 = tpu.dynamic_rotate %21 by %c223_i32_17 dim 1 : vector<8x256xf32>, i32 -> vector<8x256xf32>
    %c222_i32_18 = arith.constant 222 : i32
    %29 = tpu.dynamic_rotate %21 by %c222_i32_18 dim 1 : vector<8x256xf32>, i32 -> vector<8x256xf32>
    %30 = tpu.concatenate %21, %22, %23, %24, %25, %26, %27, %28, %29, %1 in 0 : vector<8x256xf32>, vector<8x256xf32>, vector<8x256xf32>, vector<8x256xf32>, vector<8x256xf32>, vector<8x256xf32>, vector<8x256xf32>, vector<8x256xf32>, vector<8x256xf32>, vector<1x256xf32> -> vector<73x256xf32>
    %31 = arith.truncf %30 : vector<73x256xf32> to vector<73x256xbf16>
    %cst_19 = arith.constant dense<0.000000e+00> : vector<8x256xf32>
    %32 = tpu.matmul %0, %31, %cst_19 {dimension_numbers = #tpu.dot_dimension_numbers<[1], [0], [0], [1], [0, 0, 1, 1], [], []>} : vector<8x73xbf16>, vector<73x256xbf16>, vector<8x256xf32> -> vector<8x256xf32>
    %cst_20 = arith.constant 0.000000e+00 : f32
    %33 = vector.broadcast %cst_20 : f32 to vector<8x256xf32>
    %34 = arith.maximumf %32, %33 : vector<8x256xf32>
    %c1_21 = arith.constant 1 : index
    %c0_22 = arith.constant 0 : index
    %c0_23 = arith.constant 0 : index
    %35 = vector.load %arg3[%c1_21, %c0_22, %c0_23] : memref<2x8x256xf32, #tpu.memory_space<vmem>>, vector<1x8x256xf32>
    %36 = vector.shape_cast %35 : vector<1x8x256xf32> to vector<8x256xf32>
    %37 = vector.shape_cast %34 : vector<8x256xf32> to vector<1x8x256xf32>
    tpu.vector_store %arg3[%c1_21, %c0_22, %c0_23], %37 {strides = array<i32>} : memref<2x8x256xf32, #tpu.memory_space<vmem>>, vector<1x8x256xf32>,
    return
  }
  func.func @transform_0(%arg0: i32) -> (i32, i32, i32) {
    %c0_i32 = arith.constant 0 : i32
    %c0_i32_0 = arith.constant 0 : i32
    %c0_i32_1 = arith.constant 0 : i32
    %c0_i32_2 = arith.constant 0 : i32
    return %c0_i32, %c0_i32_0, %c0_i32_1 : i32, i32, i32
  }
  func.func @transform_1(%arg0: i32) -> (i32, i32) {
    %c0_i32 = arith.constant 0 : i32
    %c0_i32_0 = arith.constant 0 : i32
    %c0_i32_1 = arith.constant 0 : i32
    return %c0_i32, %c0_i32_0 : i32, i32
  }
  func.func @transform_2(%arg0: i32) -> (i32, i32, i32) {
    %c0_i32 = arith.constant 0 : i32
    %c0_i32_0 = arith.constant 0 : i32
    %c0_i32_1 = arith.constant 0 : i32
    %c0_i32_2 = arith.constant 0 : i32
    return %c0_i32, %c0_i32_0, %c0_i32_1 : i32, i32, i32
  }
}

</mosaic_0001>

<llo_original>
// kernel: _forward_impl.1
$region0: #{_forward_impl.1}
  #allocation0 [shape = 'u32[]', space=smem, size = 0x4, offset = 0x4, fixed_abs, tag = 'smem constant byte address 0x4 - core index']
  #allocation1 [shape = 'u32[144,128]{1,0:T(1,128)}', space=vmem, size = 0x12000, scoped, tag = 'internal scratch']
  %s0 = inlined_call_operand.vmem [shape: f32[2,8,256], index: 0, kind: input, shape index: {}]
  %s1 = inlined_call_operand.vmem [shape: bf16[8,73], index: 1, kind: input, shape index: {}]
  %s2 = inlined_call_operand.vmem [shape: f32[2,8,256], index: 2, kind: output, shape index: {}]
  %s3 = sld [smem:[#allocation0]]
  $region18: #{_forward_impl.1} parent=0
    _
  %s5 = ssub.s32 1, %s3
  %s6 = scalar_select 0, %s5, %s3
  // Predicated region
  $region2: #{_forward_impl.1} parent=0 // pred_check
    _
  $region3: #{_forward_impl.1} parent=0 // pred_check_branch
    %8 = sbr.rel (0) target = $region5
  $region4: #{_forward_impl.1} parent=0 // pred_region
    _
  $region5: #{_forward_impl.1} parent=0 // pred_fallthru
    _
  // Predicated region
  $region6: #{_forward_impl.1} parent=0 // pred_check
    _
  $region7: #{_forward_impl.1} parent=0 // pred_check_branch
    %10 = sbr.rel (0) target = $region9
  $region8: #{_forward_impl.1} parent=0 // pred_region
    _
  $region9: #{_forward_impl.1} parent=0 // pred_fallthru
    _
  %v12 = vld [vmem:[%s1] sm:$0xf]
  %v13 = vld [vmem:[%s0] sm:$0xff]
  %v14 = vld [vmem:[%s0 + $0x8] sm:$0xff]
  %15 = vrot.lane.b32.xlu0 %v13, 127
  %v16 = vpop.permute.xlu0 %15
  %17 = vrot.lane.b32.xlu0 %v14, 127
  %v18 = vpop.permute.xlu0 %17
  %v19 = vlaneseq
  %v20 = vand.u32 %v19, 127
  %vm21 = vcmp.lt.s32.totalorder %v20, 127
  %v22 = vsel %vm21, %v16, %v18
  %v23 = vsel %vm21, %v18, %v16
  %24 = vrot.lane.b32.xlu0 %v13, 126
  %v25 = vpop.permute.xlu0 %24
  %26 = vrot.lane.b32.xlu0 %v14, 126
  %v27 = vpop.permute.xlu0 %26
  %vm28 = vcmp.lt.s32.totalorder %v20, 126
  %v29 = vsel %vm28, %v25, %v27
  %v30 = vsel %vm28, %v27, %v25
  %31 = vrot.lane.b32.xlu0 %v13, 112
  %v32 = vpop.permute.xlu0 %31
  %33 = vrot.lane.b32.xlu0 %v14, 112
  %v34 = vpop.permute.xlu0 %33
  %vm35 = vcmp.lt.s32.totalorder %v20, 112
  %v36 = vsel %vm35, %v32, %v34
  %v37 = vsel %vm35, %v34, %v32
  %38 = vrot.lane.b32.xlu0 %v13, 111
  %v39 = vpop.permute.xlu0 %38
  %40 = vrot.lane.b32.xlu0 %v14, 111
  %v41 = vpop.permute.xlu0 %40
  %vm42 = vcmp.lt.s32.totalorder %v20, 111
  %v43 = vsel %vm42, %v39, %v41
  %v44 = vsel %vm42, %v41, %v39
  %45 = vrot.lane.b32.xlu0 %v13, 110
  %v46 = vpop.permute.xlu0 %45
  %47 = vrot.lane.b32.xlu0 %v14, 110
  %v48 = vpop.permute.xlu0 %47
  %vm49 = vcmp.lt.s32.totalorder %v20, 110
  %v50 = vsel %vm49, %v46, %v48
  %v51 = vsel %vm49, %v48, %v46
  %52 = vrot.lane.b32.xlu0 %v13, 96
  %v53 = vpop.permute.xlu0 %52
  %54 = vrot.lane.b32.xlu0 %v14, 96
  %v55 = vpop.permute.xlu0 %54
  %vm56 = vcmp.lt.s32.totalorder %v20, 96
  %v57 = vsel %vm56, %v53, %v55
  %v58 = vsel %vm56, %v55, %v53
  %59 = vrot.lane.b32.xlu0 %v13, 95
  %v60 = vpop.permute.xlu0 %59
  %61 = vrot.lane.b32.xlu0 %v14, 95
  %v62 = vpop.permute.xlu0 %61
  %vm63 = vcmp.lt.s32.totalorder %v20, 95
  %v64 = vsel %vm63, %v60, %v62
  %v65 = vsel %vm63, %v62, %v60
  %66 = vrot.lane.b32.xlu0 %v13, 94
  %v67 = vpop.permute.xlu0 %66
  %68 = vrot.lane.b32.xlu0 %v14, 94
  %v69 = vpop.permute.xlu0 %68
  %vm70 = vcmp.lt.s32.totalorder %v20, 94
  %v71 = vsel %vm70, %v67, %v69
  %v72 = vsel %vm70, %v69, %v67
  %v73 = vpack.c.bf16 %v22, %v13
  %v74 = vpack.c.bf16 %v23, %v14
  %v75 = vpack.c.bf16 %v36, %v29
  %v76 = vpack.c.bf16 %v37, %v30
  %v77 = vpack.c.bf16 %v50, %v43
  %v78 = vpack.c.bf16 %v51, %v44
  %v79 = vpack.c.bf16 %v64, %v57
  %v80 = vpack.c.bf16 %v65, %v58
  %v81 = vpack.c.bf16 1.0, %v71
  %v82 = vpack.c.bf16 1.0, %v72
  %vm83 = vcmask 596992
  %v85 = vsel %vm83, %v12, 0
  %vm87 = vcmask 1043456
  %vm88 = vcmask 1044480
  %v89 = vsel %vm87, 4294967295, 65535
  %v90 = vsel %vm88, %v89, 0
  %v92 = vand.u32 %v81, %v90
  %v95 = vand.u32 %v82, %v90
  %97 = vmatprep.subr.bf16.mxu0 0
  %98 = vmatpush1.bf16.msra.mxu0 0
  %99 = vmatprep.subr.bf16.mxu0 0
  %100 = vmatpush1.bf16.msra.mxu0 0
  %101 = vmatprep.subr.bf16.mxu0 0
  %102 = vmatpush1.bf16.msra.mxu0 0
  %103 = vmatprep.subr.bf16.mxu0 %v95
  %104 = vmatpush1.bf16.msra.mxu0 %v92
  %105 = vmatprep.subr.bf16.mxu0 %v80
  %106 = vmatpush1.bf16.msra.mxu0 %v79
  %107 = vmatprep.subr.bf16.mxu0 %v78
  %108 = vmatpush1.bf16.msra.mxu0 %v77
  %109 = vmatprep.subr.bf16.mxu0 %v76
  %110 = vmatpush1.bf16.msra.mxu0 %v75
  %111 = vmatprep.subr.bf16.mxu0 %v74
  %112 = vmatpush1.bf16.msra.mxu0 %v73
  %113 = vmatprep.subr.bf16.mxu0 0
  %114 = vmatpush2.bf16.msra.mxu0 0
  %115 = vmatprep.subr.bf16.mxu0 0
  %116 = vmatpush2.bf16.msra.mxu0 0
  %117 = vmatprep.subr.bf16.mxu0 0
  %118 = vmatpush2.bf16.msra.mxu0 0
  %119 = vmatprep.subr.bf16.mxu0 0
  %120 = vmatpush2.bf16.msra.mxu0 0
  %121 = vmatprep.subr.bf16.mxu0 0
  %122 = vmatpush2.bf16.msra.mxu0 0
  %123 = vmatprep.subr.bf16.mxu0 0
  %124 = vmatpush2.bf16.msra.mxu0 0
  %125 = vmatprep.subr.bf16.mxu0 0
  %126 = vmatpush2.bf16.msra.mxu0 0
  %127 = vmatprep.subr.bf16.mxu0 0
  %128 = vmatpush2.bf16.msra.mxu0 0
  %129 = vmatprep.mubr.bf16.mxu0 0
  %130 = vmatmul.mubr.bf16.gmra.mxu0 %v85
  %v131 = vpop.f32.mrf.mxu0
  %v132 = vadd.f32 0.0, %v131
  %v133 = vpop.f32.mrf.mxu0
  %v134 = vadd.f32 0.0, %v133
  %v135 = vpop.f32.mrf.mxu0
  %v136 = vpop.f32.mrf.mxu0
  %137 = vdwg.mxu0
  %v138 = vmax.f32 %v132, 0.0
  %v139 = vmax.f32 %v134, 0.0
  %140 = vst [vmem:[%s2] sm:$0xff] %v138
  %141 = vst [vmem:[%s2 + $0x8] sm:$0xff] %v139
  %s142 = scalar_lea.vmem %s0, 16
  %v143 = vld [vmem:[%s142] sm:$0xff]
  %v144 = vld [vmem:[%s142 + $0x8] sm:$0xff]
  %145 = vrot.lane.b32.xlu0 %v143, 127
  %v146 = vpop.permute.xlu0 %145
  %147 = vrot.lane.b32.xlu0 %v144, 127
  %v148 = vpop.permute.xlu0 %147
  %v149 = vsel %vm21, %v146, %v148
  %v150 = vsel %vm21, %v148, %v146
  %151 = vrot.lane.b32.xlu0 %v143, 126
  %v152 = vpop.permute.xlu0 %151
  %153 = vrot.lane.b32.xlu0 %v144, 126
  %v154 = vpop.permute.xlu0 %153
  %v155 = vsel %vm28, %v152, %v154
  %v156 = vsel %vm28, %v154, %v152
  %157 = vrot.lane.b32.xlu0 %v143, 112
  %v158 = vpop.permute.xlu0 %157
  %159 = vrot.lane.b32.xlu0 %v144, 112
  %v160 = vpop.permute.xlu0 %159
  %v161 = vsel %vm35, %v158, %v160
  %v162 = vsel %vm35, %v160, %v158
  %163 = vrot.lane.b32.xlu0 %v143, 111
  %v164 = vpop.permute.xlu0 %163
  %165 = vrot.lane.b32.xlu0 %v144, 111
  %v166 = vpop.permute.xlu0 %165
  %v167 = vsel %vm42, %v164, %v166
  %v168 = vsel %vm42, %v166, %v164
  %169 = vrot.lane.b32.xlu0 %v143, 110
  %v170 = vpop.permute.xlu0 %169
  %171 = vrot.lane.b32.xlu0 %v144, 110
  %v172 = vpop.permute.xlu0 %171
  %v173 = vsel %vm49, %v170, %v172
  %v174 = vsel %vm49, %v172, %v170
  %175 = vrot.lane.b32.xlu0 %v143, 96
  %v176 = vpop.permute.xlu0 %175
  %177 = vrot.lane.b32.xlu0 %v144, 96
  %v178 = vpop.permute.xlu0 %177
  %v179 = vsel %vm56, %v176, %v178
  %v180 = vsel %vm56, %v178, %v176
  %181 = vrot.lane.b32.xlu0 %v143, 95
  %v182 = vpop.permute.xlu0 %181
  %183 = vrot.lane.b32.xlu0 %v144, 95
  %v184 = vpop.permute.xlu0 %183
  %v185 = vsel %vm63, %v182, %v184
  %v186 = vsel %vm63, %v184, %v182
  %187 = vrot.lane.b32.xlu0 %v143, 94
  %v188 = vpop.permute.xlu0 %187
  %189 = vrot.lane.b32.xlu0 %v144, 94
  %v190 = vpop.permute.xlu0 %189
  %v191 = vsel %vm70, %v188, %v190
  %v192 = vsel %vm70, %v190, %v188
  %v193 = vpack.c.bf16 %v149, %v143
  %v194 = vpack.c.bf16 %v150, %v144
  %v195 = vpack.c.bf16 %v161, %v155
  %v196 = vpack.c.bf16 %v162, %v156
  %v197 = vpack.c.bf16 %v173, %v167
  %v198 = vpack.c.bf16 %v174, %v168
  %v199 = vpack.c.bf16 %v185, %v179
  %v200 = vpack.c.bf16 %v186, %v180
  %v201 = vpack.c.bf16 1.0, %v191
  %v202 = vpack.c.bf16 1.0, %v192
  %v204 = vand.u32 %v201, %v90
  %v207 = vand.u32 %v202, %v90
  %209 = vmatprep.subr.bf16.mxu0 0
  %210 = vmatpush1.bf16.msra.mxu0 0
  %211 = vmatprep.subr.bf16.mxu0 0
  %212 = vmatpush1.bf16.msra.mxu0 0
  %213 = vmatprep.subr.bf16.mxu0 0
  %214 = vmatpush1.bf16.msra.mxu0 0
  %215 = vmatprep.subr.bf16.mxu0 %v207
  %216 = vmatpush1.bf16.msra.mxu0 %v204
  %217 = vmatprep.subr.bf16.mxu0 %v200
  %218 = vmatpush1.bf16.msra.mxu0 %v199
  %219 = vmatprep.subr.bf16.mxu0 %v198
  %220 = vmatpush1.bf16.msra.mxu0 %v197
  %221 = vmatprep.subr.bf16.mxu0 %v196
  %222 = vmatpush1.bf16.msra.mxu0 %v195
  %223 = vmatprep.subr.bf16.mxu0 %v194
  %224 = vmatpush1.bf16.msra.mxu0 %v193
  %225 = vmatprep.subr.bf16.mxu0 0
  %226 = vmatpush2.bf16.msra.mxu0 0
  %227 = vmatprep.subr.bf16.mxu0 0
  %228 = vmatpush2.bf16.msra.mxu0 0
  %229 = vmatprep.subr.bf16.mxu0 0
  %230 = vmatpush2.bf16.msra.mxu0 0
  %231 = vmatprep.subr.bf16.mxu0 0
  %232 = vmatpush2.bf16.msra.mxu0 0
  %233 = vmatprep.subr.bf16.mxu0 0
  %234 = vmatpush2.bf16.msra.mxu0 0
  %235 = vmatprep.subr.bf16.mxu0 0
  %236 = vmatpush2.bf16.msra.mxu0 0
  %237 = vmatprep.subr.bf16.mxu0 0
  %238 = vmatpush2.bf16.msra.mxu0 0
  %239 = vmatprep.subr.bf16.mxu0 0
  %240 = vmatpush2.bf16.msra.mxu0 0
  %241 = vmatprep.mubr.bf16.mxu0 0
  %242 = vmatmul.mubr.bf16.gmra.mxu0 %v85
  %v243 = vpop.f32.mrf.mxu0
  %v244 = vadd.f32 0.0, %v243
  %v245 = vpop.f32.mrf.mxu0
  %v246 = vadd.f32 0.0, %v245
  %v247 = vpop.f32.mrf.mxu0
  %v248 = vpop.f32.mrf.mxu0
  %249 = vdwg.mxu0
  %v250 = vmax.f32 %v244, 0.0
  %v251 = vmax.f32 %v246, 0.0
  %s252 = scalar_lea.vmem %s2, 16
  %253 = vst [vmem:[%s252] sm:$0xff] %v250
  %254 = vst [vmem:[%s252 + $0x8] sm:$0xff] %v251
  // Predicated region
  $region10: #{_forward_impl.1} parent=0 // pred_check
    _
  $region11: #{_forward_impl.1} parent=0 // pred_check_branch
    %256 = sbr.rel (0) target = $region13
  $region12: #{_forward_impl.1} parent=0 // pred_region
    _
  $region13: #{_forward_impl.1} parent=0 // pred_fallthru
    _
  // Predicated region
  $region14: #{_forward_impl.1} parent=0 // pred_check
    _
  $region15: #{_forward_impl.1} parent=0 // pred_check_branch
    %258 = sbr.rel (0) target = $region17
  $region16: #{_forward_impl.1} parent=0 // pred_region
    _
  $region17: #{_forward_impl.1} parent=0 // pred_fallthru
    _

</llo_original>
